<compile_context>
chip_gen: v6e
topology: v6e:2x2x1
jax: 0.10.0
libtpu: 0.0.40
codegen_flags: <defaults>
</compile_context>

<pallas_src>
import functools

import jax
import jax.numpy as jnp
from jax.experimental import pallas as pl
from jax.experimental.pallas import tpu as pltpu

_LANES = 128
_DEFAULT_VMEM_CAPACITY = 64 * 1024 * 1024   # conservative fallback (v7x per-TC physical)
_MAX_TILE_ROWS = 16384                       # plenty to amortize ~600-cycle step overhead


def _round_up(x, m):
    return ((x + m - 1) // m) * m


def _vmem_capacity_bytes():
    try:
        return int(pltpu.get_tpu_info().vmem_capacity_bytes)
    except Exception:
        return _DEFAULT_VMEM_CAPACITY


def _layernorm_kernel(x_ref, w_ref, b_ref, o_ref, *, eps, h_true):
    """One (tile_rows, H_pad) block: LayerNorm over the last axis."""
    x = x_ref[...].astype(jnp.float32)                       # (tile_rows, H_pad)
    h_pad = x.shape[-1]
    masked = h_pad != h_true                                  # static
    if masked:
        lane = jax.lax.broadcasted_iota(jnp.int32, x.shape, dimension=1)
        valid = lane < h_true
        x = jnp.where(valid, x, 0.0)                          # VPU — free while HBM-bound
    inv_h = jnp.float32(1.0 / h_true)
    u = jnp.sum(x, axis=-1, keepdims=True) * inv_h            # mean over TRUE H (XLU)
    d = x - u
    if masked:
        d = jnp.where(valid, d, 0.0)                          # keep pad lanes out of variance
    s = jnp.sum(d * d, axis=-1, keepdims=True) * inv_h        # biased variance (matches PyTorch)
    inv = jax.lax.rsqrt(s + eps)                              # EUP slot — free while HBM-bound
    y = d * inv
    w = w_ref[...].astype(jnp.float32)                        # (1, H_pad)
    b = b_ref[...].astype(jnp.float32)                        # (1, H_pad)
    o_ref[...] = (w * y + b).astype(o_ref.dtype)


def _pick_tile_rows(rows, h_pad, dtype, vmem_capacity, min_blocks):
    """Largest sublane-packed row tile fitting ~half of VMEM (incl. f32 temps)."""
    itemsize = jnp.dtype(dtype).itemsize
    # Full sublane packing: 8 rows for 32-bit, 16 for 16-bit, 32 for 8-bit dtypes.
    pack = 8 * max(1, 4 // itemsize)
    # Live VMEM per tile row:
    #   2x double-buffered input + output blocks (native dtype) -> 4 * H * itemsize
    #   ~3 full-tile f32 intermediates in the kernel body        -> 3 * H * 4
    live_per_row = 4 * h_pad * itemsize + 3 * h_pad * 4
    budget = vmem_capacity // 2                                # leave half for compiler scratch
    tile = max(pack, budget // max(1, live_per_row))
    tile = min(tile, _MAX_TILE_ROWS)
    tile = max(pack, (tile // pack) * pack)                    # multiple of pack
    rows_rounded = _round_up(rows, pack)
    tile = min(tile, rows_rounded)                             # don't exceed the data
    # Guarantee >= min_blocks grid steps so ("parallel",) shards rows across
    # both TensorCores on v7x (harmless on single-TC v5e/v6e).
    if rows > pack and min_blocks > 1:
        cap = max(pack, (pl.cdiv(rows, min_blocks) // pack) * pack)
        tile = min(tile, cap)
    return tile


def _derive_vmem_limit(tile_rows, h_pad, dtype, vmem_capacity):
    """vmem_limit_bytes from actual live bytes + headroom, capped below physical."""
    itemsize = jnp.dtype(dtype).itemsize
    live = tile_rows * (4 * h_pad * itemsize + 3 * h_pad * 4)  # blocks + f32 temps
    live += 2 * 2 * h_pad * itemsize + 2 * h_pad * 4           # resident weight/bias (+ f32 copies)
    limit = max(live + (16 << 20), 32 << 20)                   # headroom for internal scratch
    limit = min(limit, (vmem_capacity * 7) // 8)               # never request ~all of VMEM
    return int(limit)


def layer_norm(x, weight, bias, eps=1e-5, *, tile_rows=None, min_blocks=2,
               vmem_limit_bytes=None):
    """x: [..., H]; weight, bias: [H]. Matches PyTorch LayerNorm forward."""
    orig_shape = x.shape
    H = orig_shape[-1]
    rows = 1
    for d in orig_shape[:-1]:
        rows *= d
    x2 = x.reshape(rows, H)
    w2 = weight.reshape(1, H)
    b2 = bias.reshape(1, H)

    # Lane-dense layout: pad the hidden axis to a multiple of 128 so loads,
    # vreg ops and stores are unmasked. Padded lanes are masked out of the
    # statistics inside the kernel and sliced off afterwards.
    # TODO(synk): for genuinely small H (<128) a sublane repack (H on sublanes,
    # rows on lanes) would avoid the wrapper-side pad copy of x.
    H_pad = max(_LANES, _round_up(H, _LANES))
    if H_pad != H:
        pad = H_pad - H
        x2 = jnp.pad(x2, ((0, 0), (0, pad)))
        w2 = jnp.pad(w2, ((0, 0), (0, pad)))
        b2 = jnp.pad(b2, ((0, 0), (0, pad)))

    vmem_capacity = _vmem_capacity_bytes()
    if tile_rows is None:
        tile_rows = _pick_tile_rows(rows, H_pad, x.dtype, vmem_capacity, min_blocks)
    if vmem_limit_bytes is None:
        vmem_limit_bytes = _derive_vmem_limit(tile_rows, H_pad, x.dtype, vmem_capacity)

    # cdiv grid: no padding concat on rows — Pallas masks the overhanging final
    # block (OOB reads padded, OOB writes discarded); rows are independent.
    grid = (pl.cdiv(rows, tile_rows),)

    itemsize = jnp.dtype(x.dtype).itemsize
    cost = pl.CostEstimate(
        flops=8 * rows * H_pad,
        transcendentals=rows,
        bytes_accessed=2 * rows * H_pad * itemsize,
    )

    out = pl.pallas_call(
        functools.partial(_layernorm_kernel, eps=float(eps), h_true=H),
        out_shape=jax.ShapeDtypeStruct((rows, H_pad), x.dtype),
        grid_spec=pltpu.PrefetchScalarGridSpec(
            num_scalar_prefetch=0,
            grid=grid,
            in_specs=[
                pl.BlockSpec((tile_rows, H_pad), lambda i: (i, 0)),
                pl.BlockSpec((1, H_pad), lambda i: (0, 0)),   # weight: resident
                pl.BlockSpec((1, H_pad), lambda i: (0, 0)),   # bias: resident
            ],
            out_specs=pl.BlockSpec((tile_rows, H_pad), lambda i: (i, 0)),
        ),
        compiler_params=pltpu.CompilerParams(
            dimension_semantics=("parallel",),                # megacore sharding on v7x
            vmem_limit_bytes=int(vmem_limit_bytes),
        ),
        cost_estimate=cost,
    )(x2, w2, b2)

    if H_pad != H:
        out = out[:, :H]
    return out.reshape(orig_shape)


if __name__ == "__main__":
    B, S, H = 2, 8, 32
    key = jax.random.PRNGKey(0)
    x = jax.random.normal(key, (B, S, H), dtype=jnp.float32)

    # Deterministic parameter init matching nn.Parameter(torch.ones/zeros)
    weight = jnp.ones((H,), dtype=jnp.float32)
    bias = jnp.zeros((H,), dtype=jnp.float32)

    y = layer_norm(x, weight, bias, eps=1e-5)
    y = jax.block_until_ready(y)

    # reference check in plain JAX
    u = jnp.mean(x, axis=-1, keepdims=True)
    s = jnp.mean((x - u) ** 2, axis=-1, keepdims=True)
    ref = weight * ((x - u) / jnp.sqrt(s + 1e-5)) + bias
    assert jnp.allclose(y, ref, atol=1e-5, rtol=1e-5), "mismatch vs reference"

    print("KERNEL_OK")
</pallas_src>

<mosaic_0001>
module attributes {stable_mosaic.version = 11 : i64} {
  func.func @_layernorm_kernel(%arg0: i32, %arg1: memref<8x128xf32, #tpu.memory_space<vmem>>, %arg2: memref<1x128xf32, #tpu.memory_space<vmem>>, %arg3: memref<1x128xf32, #tpu.memory_space<vmem>>, %arg4: memref<8x128xf32, #tpu.memory_space<vmem>>) attributes {dimension_semantics = [#tpu.dimension_semantics<parallel>], iteration_bounds = array<i64: 2>, scalar_prefetch = 0 : i64, scratch_operands = 0 : i64, tpu.core_type = #tpu.core_type<tc>, window_params = [{transform_indices = @transform_0, window_bounds = array<i64: 8, 128>}, {pipeline_mode = #tpu.pipeline_mode<synchronous>, transform_indices = @transform_1, window_bounds = array<i64: 1, 128>}, {pipeline_mode = #tpu.pipeline_mode<synchronous>, transform_indices = @transform_2, window_bounds = array<i64: 1, 128>}, {transform_indices = @transform_3, window_bounds = array<i64: 8, 128>}]} {
    %c0 = arith.constant 0 : index
    %c0_0 = arith.constant 0 : index
    %0 = vector.load %arg1[%c0, %c0_0] : memref<8x128xf32, #tpu.memory_space<vmem>>, vector<8x128xf32>
    %1 = tpu.iota {dimensions = array<i32: 1>} : vector<8x128xi32>
    %c32_i32 = arith.constant 32 : i32
    %2 = vector.broadcast %c32_i32 : i32 to vector<8x128xi32>
    %3 = arith.cmpi slt, %1, %2 : vector<8x128xi32>
    %cst = arith.constant 0.000000e+00 : f32
    %4 = vector.broadcast %cst : f32 to vector<8x128xf32>
    %5 = arith.select %3, %0, %4 : vector<8x128xi1>, vector<8x128xf32>
    %cst_1 = arith.constant dense<0.000000e+00> : vector<8xf32>
    %6 = vector.multi_reduction <add>, %5, %cst_1 [1] : vector<8x128xf32> to vector<8xf32>
    %7 = vector.shape_cast %6 : vector<8xf32> to vector<8x1xf32>
    %cst_2 = arith.constant 3.125000e-02 : f32
    %8 = vector.broadcast %cst_2 : f32 to vector<8x1xf32>
    %9 = arith.mulf %7, %8 : vector<8x1xf32>
    %10 = vector.broadcast %9 : vector<8x1xf32> to vector<8x128xf32>
    %11 = arith.subf %5, %10 : vector<8x128xf32>
    %cst_3 = arith.constant 0.000000e+00 : f32
    %12 = vector.broadcast %cst_3 : f32 to vector<8x128xf32>
    %13 = arith.select %3, %11, %12 : vector<8x128xi1>, vector<8x128xf32>
    %14 = arith.mulf %13, %13 : vector<8x128xf32>
    %cst_4 = arith.constant dense<0.000000e+00> : vector<8xf32>
    %15 = vector.multi_reduction <add>, %14, %cst_4 [1] : vector<8x128xf32> to vector<8xf32>
    %16 = vector.shape_cast %15 : vector<8xf32> to vector<8x1xf32>
    %cst_5 = arith.constant 3.125000e-02 : f32
    %17 = vector.broadcast %cst_5 : f32 to vector<8x1xf32>
    %18 = arith.mulf %16, %17 : vector<8x1xf32>
    %cst_6 = arith.constant 9.99999974E-6 : f32
    %19 = vector.broadcast %cst_6 : f32 to vector<8x1xf32>
    %20 = arith.addf %18, %19 : vector<8x1xf32>
    %21 = math.rsqrt %20 : vector<8x1xf32>
    %22 = vector.broadcast %21 : vector<8x1xf32> to vector<8x128xf32>
    %23 = arith.mulf %13, %22 : vector<8x128xf32>
    %c0_7 = arith.constant 0 : index
    %c0_8 = arith.constant 0 : index
    %24 = vector.load %arg2[%c0_7, %c0_8] : memref<1x128xf32, #tpu.memory_space<vmem>>, vector<1x128xf32>
    %c0_9 = arith.constant 0 : index
    %c0_10 = arith.constant 0 : index
    %25 = vector.load %arg3[%c0_9, %c0_10] : memref<1x128xf32, #tpu.memory_space<vmem>>, vector<1x128xf32>
    %26 = vector.broadcast %24 : vector<1x128xf32> to vector<8x128xf32>
    %27 = arith.mulf %26, %23 : vector<8x128xf32>
    %28 = vector.broadcast %25 : vector<1x128xf32> to vector<8x128xf32>
    %29 = arith.addf %27, %28 : vector<8x128xf32>
    %c0_11 = arith.constant 0 : index
    %c0_12 = arith.constant 0 : index
    %30 = vector.load %arg4[%c0_11, %c0_12] : memref<8x128xf32, #tpu.memory_space<vmem>>, vector<8x128xf32>
    tpu.vector_store %arg4[%c0_11, %c0_12], %29 {strides = array<i32>} : memref<8x128xf32, #tpu.memory_space<vmem>>, vector<8x128xf32>,
    return
  }
  func.func @transform_0(%arg0: i32) -> (i32, i32) {
    %c0_i32 = arith.constant 0 : i32
    %c0_i32_0 = arith.constant 0 : i32
    return %arg0, %c0_i32 : i32, i32
  }
  func.func @transform_1(%arg0: i32) -> (i32, i32) {
    %c0_i32 = arith.constant 0 : i32
    %c0_i32_0 = arith.constant 0 : i32
    %c0_i32_1 = arith.constant 0 : i32
    return %c0_i32, %c0_i32_0 : i32, i32
  }
  func.func @transform_2(%arg0: i32) -> (i32, i32) {
    %c0_i32 = arith.constant 0 : i32
    %c0_i32_0 = arith.constant 0 : i32
    %c0_i32_1 = arith.constant 0 : i32
    return %c0_i32, %c0_i32_0 : i32, i32
  }
  func.func @transform_3(%arg0: i32) -> (i32, i32) {
    %c0_i32 = arith.constant 0 : i32
    %c0_i32_0 = arith.constant 0 : i32
    return %arg0, %c0_i32 : i32, i32
  }
}

</mosaic_0001>

<llo_original>
// kernel: tpu_custom_call.1
$region0: #{tpu_custom_call.1}
  #allocation0 [shape = 'u32[]', space=smem, size = 0x4, offset = 0x4, fixed_abs, tag = 'smem constant byte address 0x4 - core index']
  #allocation1 [shape = 'u32[144,128]{1,0:T(1,128)}', space=vmem, size = 0x12000, scoped, tag = 'internal scratch']
  %s0 = inlined_call_operand.hbm [shape: f32[16,128], index: 0, kind: input, shape index: {}]
  %s1 = inlined_call_operand.vmem [shape: f32[1,128], index: 1, kind: input, shape index: {}]
  %s2 = inlined_call_operand.vmem [shape: f32[1,128], index: 2, kind: input, shape index: {}]
  %s3 = inlined_call_operand.hbm [shape: f32[16,128], index: 3, kind: output, shape index: {}]
  %s4 = sld [smem:[#allocation0]]
  $region49: #{tpu_custom_call.1} parent=0
    _
  %s6 = ssub.s32 1, %s4
  %s7 = scalar_select 0, %s6, %s4
  $region1: #{tpu_custom_call.1} parent=0
    #allocation2 [shape = 'u8[8192]{0}', space=vmem, size = 0x2000, scoped, tag = 'input window, operand 0']
    #allocation3 [shape = 's32[2]{0}', space=sflag, size = 0x8, scoped, tag = 'scoped memory for tpu_custom_call.1']
    #allocation4 [shape = 's32[2]{0}', space=sflag, size = 0x8, scoped, tag = 'scoped memory for tpu_custom_call.1']
    #allocation5 [shape = 'u8[8192]{0}', space=vmem, size = 0x2000, scoped, tag = 'output window, operand 0']
    %8 = vsyncpa [#allocation3], 0
    %s9 = scalar_lea.sflag [#allocation3], 1
    %10 = vsyncpa %s9, 0
    %11 = vsyncpa [#allocation4], 0
    %s12 = scalar_lea.sflag [#allocation4], 1
    %13 = vsyncpa %s12, 0
    loop: start=0, step=1, limit=4
    $region2: #{tpu_custom_call.1} parent=1 // loop_pre_header
      _
    $region3: #{tpu_custom_call.1} parent=1 // loop_header
      %s15 = sphi 0, %s19
      %p16 = scmp.ge.s32.totalorder %s15, 4
      %s25 = sphi 0, %s27
      %s28 = sphi 0, %s25
      %s29 = sphi 0, %s28
      %s45 = sphi 0, %s29
      %s49 = sphi 0, %s49
      %s51 = sphi 0, %s49
      %s52 = sphi 0, %s51
      %s66 = sphi 0, %s52
      %s70 = sphi 0, %s70
      %s72 = sphi 0, %s70
      %s73 = sphi 0, %s72
      %s87 = sphi 0, %s73
      %s93 = sphi 0, %s95
      %s96 = sphi 0, %s93
      %s97 = sphi 0, %s96
      %s113 = sphi 0, %s97
    $region4: #{tpu_custom_call.1} parent=1 // loop_header_branch
      %18 = sbr.rel (%p16) target = $region8
    $region5: #{tpu_custom_call.1} parent=1 // loop_body
      %s20 = ssub.s32 %s15, 1
      %s21 = ssub.s32 %s15, 2
      %s22 = sadd.s32 %s15, 1
      %s23 = ssub.s32 %s15, %s22
      %p24 = scmp.eq.s32.totalorder %s23, 0
      %s26 = sadd.s32 %s25, 1
      %s27 = scalar_select %p24, %s25, %s26
      %p30 = pneg %p24
      %p31 = scmp.eq.s32.totalorder %s15, 1
      %p32 = por %p30, %p31
      %p33 = scmp.ne.s32.totalorder %s25, %s28
      %p34 = scmp.eq.s32.totalorder %s15, 0
      %p35 = por %p33, %p34
      %p36 = scmp.ne.s32.totalorder %s25, %s28
      %p37 = scmp.eq.s32.totalorder %s20, 1
      %p38 = por %p36, %p37
      %p39 = scmp.ne.s32.totalorder %s28, %s29
      %p40 = scmp.eq.s32.totalorder %s20, 0
      %p41 = por %p39, %p40
      %p42 = scmp.ne.s32.totalorder %s28, %s29
      %p43 = scmp.eq.s32.totalorder %s21, 1
      %p44 = por %p42, %p43
      %p46 = scmp.ne.s32.totalorder %s29, %s45
      %p47 = scmp.eq.s32.totalorder %s21, 0
      %p48 = por %p46, %p47
      %s50 = sadd.s32 %s49, 1
      %p53 = scmp.eq.s32.totalorder %s15, 1
      %p54 = scmp.ne.s32.totalorder %s49, %s51
      %p55 = scmp.eq.s32.totalorder %s15, 0
      %p56 = por %p54, %p55
      %p57 = scmp.ne.s32.totalorder %s49, %s51
      %p58 = scmp.eq.s32.totalorder %s20, 1
      %p59 = por %p57, %p58
      %p60 = scmp.ne.s32.totalorder %s51, %s52
      %p61 = scmp.eq.s32.totalorder %s20, 0
      %p62 = por %p60, %p61
      %p63 = scmp.ne.s32.totalorder %s51, %s52
      %p64 = scmp.eq.s32.totalorder %s21, 1
      %p65 = por %p63, %p64
      %p67 = scmp.ne.s32.totalorder %s52, %s66
      %p68 = scmp.eq.s32.totalorder %s21, 0
      %p69 = por %p67, %p68
      %s71 = sadd.s32 %s70, 1
      %p74 = scmp.eq.s32.totalorder %s15, 1
      %p75 = scmp.ne.s32.totalorder %s70, %s72
      %p76 = scmp.eq.s32.totalorder %s15, 0
      %p77 = por %p75, %p76
      %p78 = scmp.ne.s32.totalorder %s70, %s72
      %p79 = scmp.eq.s32.totalorder %s20, 1
      %p80 = por %p78, %p79
      %p81 = scmp.ne.s32.totalorder %s72, %s73
      %p82 = scmp.eq.s32.totalorder %s20, 0
      %p83 = por %p81, %p82
      %p84 = scmp.ne.s32.totalorder %s72, %s73
      %p85 = scmp.eq.s32.totalorder %s21, 1
      %p86 = por %p84, %p85
      %p88 = scmp.ne.s32.totalorder %s73, %s87
      %p89 = scmp.eq.s32.totalorder %s21, 0
      %p90 = por %p88, %p89
      %s91 = ssub.s32 %s15, %s22
      %p92 = scmp.eq.s32.totalorder %s91, 0
      %s94 = sadd.s32 %s93, 1
      %s95 = scalar_select %p92, %s93, %s94
      %p98 = pneg %p92
      %p99 = scmp.eq.s32.totalorder %s15, 1
      %p100 = por %p98, %p99
      %p101 = scmp.ne.s32.totalorder %s93, %s96
      %p102 = scmp.eq.s32.totalorder %s15, 0
      %p103 = por %p101, %p102
      %p104 = scmp.ne.s32.totalorder %s93, %s96
      %p105 = scmp.eq.s32.totalorder %s20, 1
      %p106 = por %p104, %p105
      %p107 = scmp.ne.s32.totalorder %s96, %s97
      %p108 = scmp.eq.s32.totalorder %s20, 0
      %p109 = por %p107, %p108
      %p110 = scmp.ne.s32.totalorder %s96, %s97
      %p111 = scmp.eq.s32.totalorder %s21, 1
      %p112 = por %p110, %p111
      %p114 = scmp.ne.s32.totalorder %s97, %s113
      %p115 = scmp.eq.s32.totalorder %s21, 0
      %p116 = por %p114, %p115
      %p117 = scmp.le.s32.totalorder 1, %s15
      %p118 = scmp.lt.s32.totalorder %s15, 3
      %p119 = pnand %p117, %p118
      %p120 = pneg %p119
      // Predicated region
      $region9: #{tpu_custom_call.1} parent=5 // pred_check
        _
      $region10: #{tpu_custom_call.1} parent=5 // pred_check_branch
        %122 = sbr.rel (%p119) target = $region12
      $region11: #{tpu_custom_call.1} parent=5 // pred_region
        %s123 = ssub.s32 %s15, 1
        // Predicated region
        $region13: #{tpu_custom_call.1} parent=11 // pred_check
          %p124 = pneg %p62
        $region14: #{tpu_custom_call.1} parent=11 // pred_check_branch
          %126 = sbr.rel (%p124) target = $region16
        $region15: #{tpu_custom_call.1} parent=11 // pred_region
          _
        $region16: #{tpu_custom_call.1} parent=11 // pred_fallthru
          _
        // Predicated region
        $region17: #{tpu_custom_call.1} parent=11 // pred_check
          %p127 = pneg %p83
        $region18: #{tpu_custom_call.1} parent=11 // pred_check_branch
          %129 = sbr.rel (%p127) target = $region20
        $region19: #{tpu_custom_call.1} parent=11 // pred_region
          _
        $region20: #{tpu_custom_call.1} parent=11 // pred_fallthru
          _
      $region12: #{tpu_custom_call.1} parent=5 // pred_fallthru
        _
      %p130 = scmp.lt.s32.totalorder %s15, 2
      // Predicated region
      $region21: #{tpu_custom_call.1} parent=5 // pred_check
        %p131 = pneg %p130
      $region22: #{tpu_custom_call.1} parent=5 // pred_check_branch
        %133 = sbr.rel (%p131) target = $region24
      $region23: #{tpu_custom_call.1} parent=5 // pred_region
        // Predicated region
        $region25: #{tpu_custom_call.1} parent=23 // pred_check
          %p134 = pneg %p35
        $region26: #{tpu_custom_call.1} parent=23 // pred_check_branch
          %136 = sbr.rel (%p134) target = $region28
        $region27: #{tpu_custom_call.1} parent=23 // pred_region
          %s137 = sand.u32 %s25, 1
          %s138 = scalar_lea.sflag [#allocation3], %s137
          %s139 = sand.u32 %s25, 1
          %s140 = smul.addr %s139, 8
          %s141 = scalar_lea.vmem [#allocation2], %s140
          %s143 = ssub.s32 128, 128
          %144 = vsyncadd %s138, %s143
          %s145 = smul.addr %s15, 128
          %s146 = scalar_lea.hbm %s0, %s145
          %s148 = sshll.u32 %s141, 4
          %s149 = int_to_ptr.vmem [resolvable:$true] %s148
          %151 = dma.hbm_to_vmem [thread:$0]  %s146, 128, %s149, %s138
        $region28: #{tpu_custom_call.1} parent=23 // pred_fallthru
          _
      $region24: #{tpu_custom_call.1} parent=5 // pred_fallthru
        _
      %p152 = scmp.le.s32.totalorder 1, %s15
      %p153 = scmp.lt.s32.totalorder %s15, 3
      %p154 = pnand %p152, %p153
      %p155 = pneg %p154
      // Predicated region
      $region29: #{tpu_custom_call.1} parent=5 // pred_check
        _
      $region30: #{tpu_custom_call.1} parent=5 // pred_check_branch
        %157 = sbr.rel (%p154) target = $region32
      $region31: #{tpu_custom_call.1} parent=5 // pred_region
        %s158 = ssub.s32 %s15, 1
        %s159 = sand.u32 %s28, 1
        %s160 = scalar_lea.sflag [#allocation3], %s159
        %s161 = sand.u32 %s28, 1
        %s162 = smul.addr %s161, 8
        %s163 = scalar_lea.vmem [#allocation2], %s162
        // Predicated region
        $region33: #{tpu_custom_call.1} parent=31 // pred_check
          %p164 = pneg %p41
        $region34: #{tpu_custom_call.1} parent=31 // pred_check_branch
          %166 = sbr.rel (%p164) target = $region36
        $region35: #{tpu_custom_call.1} parent=31 // pred_region
          %167 = dma.done %s160, 128
        $region36: #{tpu_custom_call.1} parent=31 // pred_fallthru
          _
        %s168 = sand.u32 %s28, 1
        %s169 = scalar_lea.sflag [#allocation3], %s168
        %s170 = sand.u32 %s28, 1
        %s171 = smul.addr %s170, 8
        %s172 = scalar_lea.vmem [#allocation2], %s171
        %p173 = pneg %p41
        %p174 = pneg %p38
        %p175 = pneg %p62
        %p176 = pneg %p59
        %p177 = pneg %p83
        %p178 = pneg %p80
        %p179 = pneg %p109
        %p180 = pneg %p106
        %s181 = sand.u32 %s96, 1
        %s182 = scalar_lea.sflag [#allocation4], %s181
        %s183 = sand.u32 %s96, 1
        %s184 = smul.addr %s183, 8
        %s185 = scalar_lea.vmem [#allocation5], %s184
        %v186 = vld [vmem:[%s163] sm:$0xff]
        %v187 = vlaneseq
        %v188 = vand.u32 %v187, 127
        %vm189 = vcmp.lt.s32.totalorder %v188, 32
        %v190 = vsel %vm189, %v186, 0.0
        %191 = vadd.xlane.f32.xlu0 %v190
        %v192 = vpop.xlane.xlu0 %191
        %v193 = vmul.f32 %v192, 0.03125
        %v194 = vsub.f32 %v190, %v193
        %v195 = vsel %vm189, %v194, 0.0
        %v196 = vmul.f32 %v195, %v195
        %197 = vadd.xlane.f32.xlu0 %v196
        %v198 = vpop.xlane.xlu0 %197
        %v199 = vmul.f32 %v198, 0.03125
        %v200 = vadd.f32 %v199, 1e-05
        %v201 = vrsqrt.pop %v200
        %v202 = vmul.f32 %v195, %v201
        %v203 = vld [vmem:[%s1] sm:$0x1]
        %v204 = vld [vmem:[%s2] sm:$0x1]
        %v206 = vlaneseq
        %v207 = vshrl.u32 %v206, 7
        %v208 = vsub.s32 0, %v207
        %v209 = vrot.slane %v203, %v208
        %v211 = vmul.f32 %v209, %v202
        %v213 = vlaneseq
        %v214 = vshrl.u32 %v213, 7
        %v215 = vsub.s32 0, %v214
        %v216 = vrot.slane %v204, %v215
        %v218 = vadd.f32 %v211, %v216
        %219 = vst [vmem:[%s185] sm:$0xff] %v218
        %s220 = sand.u32 %s96, 1
        %s221 = scalar_lea.sflag [#allocation4], %s220
        %s222 = sand.u32 %s96, 1
        %s223 = smul.addr %s222, 8
        %s224 = scalar_lea.vmem [#allocation5], %s223
        // Predicated region
        $region37: #{tpu_custom_call.1} parent=31 // pred_check
          %p225 = pneg %p106
        $region38: #{tpu_custom_call.1} parent=31 // pred_check_branch
          %227 = sbr.rel (%p225) target = $region40
        $region39: #{tpu_custom_call.1} parent=31 // pred_region
          %s229 = ssub.s32 128, 128
          %230 = vsyncadd %s221, %s229
          %s231 = smul.addr %s20, 128
          %s232 = scalar_lea.hbm %s3, %s231
          %s234 = sshll.u32 %s224, 4
          %s235 = int_to_ptr.vmem [resolvable:$true] %s234
          %237 = dma.vmem_to_hbm [thread:$0]  %s235, 128, %s232, %s221
        $region40: #{tpu_custom_call.1} parent=31 // pred_fallthru
          _
      $region32: #{tpu_custom_call.1} parent=5 // pred_fallthru
        _
      %p238 = scmp.le.s32.totalorder 2, %s15
      // Predicated region
      $region41: #{tpu_custom_call.1} parent=5 // pred_check
        %p239 = pneg %p238
      $region42: #{tpu_custom_call.1} parent=5 // pred_check_branch
        %241 = sbr.rel (%p239) target = $region44
      $region43: #{tpu_custom_call.1} parent=5 // pred_region
        %s242 = ssub.s32 %s15, 2
        // Predicated region
        $region45: #{tpu_custom_call.1} parent=43 // pred_check
          %p243 = pneg %p112
        $region46: #{tpu_custom_call.1} parent=43 // pred_check_branch
          %245 = sbr.rel (%p243) target = $region48
        $region47: #{tpu_custom_call.1} parent=43 // pred_region
          %s246 = sand.u32 %s97, 1
          %s247 = scalar_lea.sflag [#allocation4], %s246
          %s248 = sand.u32 %s97, 1
          %s249 = smul.addr %s248, 8
          %s250 = scalar_lea.vmem [#allocation5], %s249
          %251 = dma.done %s247, 128
        $region48: #{tpu_custom_call.1} parent=43 // pred_fallthru
          _
      $region44: #{tpu_custom_call.1} parent=5 // pred_fallthru
        _
    $region6: #{tpu_custom_call.1} parent=1 // loop_footer
      %s19 = sadd.s32 1, %s15
    $region7: #{tpu_custom_call.1} parent=1 // loop_footer_branch
      %14 = sbr.rel target = $region3
    $region8: #{tpu_custom_call.1} parent=1 // loop_exit
      _
    %252 = vsyncpa [#allocation3], 1
    %s253 = scalar_lea.sflag [#allocation3], 1
    %254 = vsyncpa %s253, 1
    %255 = vsyncpa [#allocation4], 1
    %s256 = scalar_lea.sflag [#allocation4], 1
    %257 = vsyncpa %s256, 1

</llo_original>
